<compile_context>
chip_gen: v7x
topology: tpu7x:2x2x1
jax: 0.10.0
libtpu: 0.0.40
codegen_flags: <defaults>
</compile_context>

<pallas_src>
import jax
import jax.numpy as jnp
from jax.experimental import pallas as pl
from jax.experimental.pallas import tpu as pltpu


# ---------------------------------------------------------------------------
# glue: MLP.ax construction (done once at init time in plain JAX)
# ---------------------------------------------------------------------------
def seq2dag(n):
    # sequential DAG: edge t -> t+1
    return jnp.eye(n, k=1, dtype=jnp.float32)


def construct_S(A):
    # TODO(synk): construct_S from the reference repo is not provided; S = A is
    # used as a deterministic surrogate so MLP.ax has the right shape/semantics
    # ((lag, T, p)).
    return A


def build_ax(X, lag):
    """Replicates cMLP.__init__ ax construction: ax[i]=cur@X[0], cur<-S@cur, zero diag."""
    _, T, _ = X.shape
    S = construct_S(seq2dag(T))
    ax = []
    cur = S
    for _ in range(lag):
        ax.append(cur @ X[0])
        cur = S @ cur
        cur = cur - jnp.diag(jnp.diag(cur))
    return jnp.stack(ax)  # (lag, T, p)


# ---------------------------------------------------------------------------
# one-time preparation (hoisted out of the per-call path)
# ---------------------------------------------------------------------------
def prepare_cmlp_params(w0, b0, fc_ws, fc_bs):
    """Fold the p per-series networks into one wide fused network.

    w0:    (p, h0, p, lag)   first Conv1d weights, stacked over networks
    b0:    (p, h0)
    fc_ws: list of (p, d_out, d_in) 1x1 Conv1d weights
    fc_bs: list of (p, d_out)       1x1 Conv1d biases

    Returns:
      w0_big:    (lag*p, p*h0)  networks concatenated along the output dim,
                                lag-flip baked in
      b0_big:    (1, p*h0)
      fc_params: list of (Wbd, b_big); Wbd is block-diagonal (p*d_in, p*d_out)
    """
    p, h0, p2, lag = w0.shape
    assert p2 == p
    # w0_big[j*p + c, n*h0 + m] = w0[n, m, c, lag-1-j]
    w0_flat = jnp.transpose(jnp.flip(w0, axis=-1), (0, 3, 2, 1)).reshape(p, lag * p, h0)
    w0_big = jnp.transpose(w0_flat, (1, 0, 2)).reshape(lag * p, p * h0)
    b0_big = b0.reshape(1, p * h0)

    eye = jnp.eye(p, dtype=w0.dtype)
    fc_params = []
    for W, b in zip(fc_ws, fc_bs):
        pn, d_out, d_in = W.shape
        assert pn == p
        W_t = jnp.transpose(W, (0, 2, 1))                    # (p, d_in, d_out)
        Wbd = eye[:, :, None, None] * W_t[:, None, :, :]     # (p, p, d_in, d_out), diag blocks
        Wbd = jnp.transpose(Wbd, (0, 2, 1, 3)).reshape(p * d_in, p * d_out)
        fc_params.append((Wbd, b.reshape(1, p * d_out)))
    return w0_big, b0_big, fc_params


def prepare_ax(ax):
    """Flatten MLP.ax (lag, T, p) -> (T, lag*p) once (ax is fixed at init time,
    so this never runs on the per-call path)."""
    lag, T, p = ax.shape
    return jnp.transpose(ax, (1, 0, 2)).reshape(T, lag * p)


# ---------------------------------------------------------------------------
# Pallas kernel: one T tile of the whole fused network
# ---------------------------------------------------------------------------
def _make_kernel(n_fc):
    def kernel(ax_ref, w0_ref, b0_ref, *rest):
        o_ref = rest[-1]
        # first (folded lag-conv) layer: (Tt, lag*p) @ (lag*p, p*h0)  -> MXU
        h = jnp.dot(ax_ref[...], w0_ref[...],
                    preferred_element_type=jnp.float32) + b0_ref[...]
        # fused 1x1 conv layers: block-diagonal (p*d_in, p*d_out) matmuls
        for k in range(n_fc):
            w_ref = rest[2 * k]
            b_ref = rest[2 * k + 1]
            h = jnp.maximum(h, 0.0)                           # VPU
            h = jnp.dot(h, w_ref[...],
                        preferred_element_type=jnp.float32) + b_ref[...]
        o_ref[...] = h.astype(o_ref.dtype)                    # (Tt, p) write
    return kernel


def _pick_t_tile(T):
    """Largest T tile (multiple of 8, <= 512) dividing T; prefer >= 2 grid
    steps when T allows so both v7x TensorCores get work."""
    if T % 16 == 0 and T // 2 <= 512:
        return max(8, T // 2)
    for cand in (512, 256, 128, 64, 32, 16, 8):
        if T % cand == 0:
            return cand
    return T  # odd T: single full-extent block


def cmlp_forward(ax_flat, w0_big, b0_big, fc_params):
    """
    ax_flat: (T, lag*p)   pre-flattened shared MLP.ax
    returns (1, T, p) -- matches torch.cat([net() for net in nets], dim=2)
    """
    T, lp = ax_flat.shape
    lp2, ph0 = w0_big.shape
    assert lp == lp2
    assert len(fc_params) >= 1, "need at least the final output layer"
    p = fc_params[-1][0].shape[1]  # last fused layer emits (T, p)

    t_tile = _pick_t_tile(T)
    grid = (pl.cdiv(T, t_tile),)

    args = [ax_flat, w0_big, b0_big]
    in_specs = [
        pl.BlockSpec((t_tile, lp), lambda i: (i, 0)),
        # weights / biases: full-extent blocks, constant index map -> resident
        # in VMEM across all T tiles (no per-step weight DMA).
        pl.BlockSpec((lp, ph0), lambda i: (0, 0)),
        pl.BlockSpec((1, ph0), lambda i: (0, 0)),
    ]
    for Wbd, b_big in fc_params:
        args += [Wbd, b_big]
        in_specs += [
            pl.BlockSpec(Wbd.shape, lambda i: (0, 0)),
            pl.BlockSpec(b_big.shape, lambda i: (0, 0)),
        ]

    out = pl.pallas_call(
        _make_kernel(len(fc_params)),
        out_shape=jax.ShapeDtypeStruct((T, p), jnp.float32),
        grid=grid,
        in_specs=in_specs,
        out_specs=pl.BlockSpec((t_tile, p), lambda i: (i, 0)),
        compiler_params=pltpu.CompilerParams(dimension_semantics=("parallel",)),
    )(*args)

    return out[None]  # (1, T, p) -- no transpose needed


# ---------------------------------------------------------------------------
# pure-JAX reference (mirrors MLP.forward / cMLP.forward exactly)
# ---------------------------------------------------------------------------
def ref_forward(ax, w0, b0, fc_ws, fc_bs):
    lag, T, p = ax.shape
    h0 = w0.shape[1]
    cols = []
    for n in range(p):
        h = jnp.zeros((T, h0), jnp.float32)
        for i in range(lag):
            h = h + ax[i] @ w0[n, :, :, lag - 1 - i].T
        h = h + b0[n]
        for W, b in zip(fc_ws, fc_bs):
            h = jnp.maximum(h, 0.0)
            h = h @ W[n].T + b[n]
        cols.append(h)  # (T, 1)
    return jnp.concatenate(cols, axis=1)[None]  # (1, T, p)


# ---------------------------------------------------------------------------
if __name__ == "__main__":
    key = jax.random.PRNGKey(0)
    p, T, lag = 4, 64, 3          # num_series, time steps, lag
    hidden = [32, 32]             # MLP hidden sizes
    B = 1

    keys = iter(jax.random.split(key, 16))
    X = jax.random.normal(next(keys), (B, T, p), jnp.float32)
    ax = build_ax(X, lag)         # (lag, T, p)  -> MLP.ax

    # deterministic parameter init, stacked over the p networks
    w0 = 0.1 * jax.random.normal(next(keys), (p, hidden[0], p, lag), jnp.float32)
    b0 = 0.1 * jax.random.normal(next(keys), (p, hidden[0]), jnp.float32)
    fc_ws, fc_bs = [], []
    for d_in, d_out in zip(hidden, hidden[1:] + [1]):
        fc_ws.append(0.1 * jax.random.normal(next(keys), (p, d_out, d_in), jnp.float32))
        fc_bs.append(0.1 * jax.random.normal(next(keys), (p, d_out), jnp.float32))

    # one-time fused-parameter + ax preparation (hoisted out of the call path;
    # cMLP fixes ax at __init__ and forward() takes no arguments)
    w0_big, b0_big, fc_params = prepare_cmlp_params(w0, b0, fc_ws, fc_bs)
    ax_flat = prepare_ax(ax)

    fwd = jax.jit(cmlp_forward)
    out = fwd(ax_flat, w0_big, b0_big, fc_params)
    out = jax.block_until_ready(out)

    ref = ref_forward(ax, w0, b0, fc_ws, fc_bs)
    assert out.shape == (1, T, p), out.shape
    assert jnp.allclose(out, ref, atol=1e-4, rtol=1e-4), float(jnp.max(jnp.abs(out - ref)))
    print("KERNEL_OK")
</pallas_src>

<mosaic_0001>
module attributes {stable_mosaic.version = 11 : i64} {
  func.func @kernel(%arg0: i32, %arg1: memref<32x12xf32, #tpu.memory_space<vmem>>, %arg2: memref<12x128xf32, #tpu.memory_space<vmem>>, %arg3: memref<1x128xf32, #tpu.memory_space<vmem>>, %arg4: memref<128x128xf32, #tpu.memory_space<vmem>>, %arg5: memref<1x128xf32, #tpu.memory_space<vmem>>, %arg6: memref<128x4xf32, #tpu.memory_space<vmem>>, %arg7: memref<1x4xf32, #tpu.memory_space<vmem>>, %arg8: memref<32x4xf32, #tpu.memory_space<vmem>>) attributes {dimension_semantics = [#tpu.dimension_semantics<parallel>], iteration_bounds = array<i64: 2>, scalar_prefetch = 0 : i64, scratch_operands = 0 : i64, tpu.core_type = #tpu.core_type<tc>, window_params = [{transform_indices = @transform_0, window_bounds = array<i64: 32, 12>}, {pipeline_mode = #tpu.pipeline_mode<synchronous>, transform_indices = @transform_1, window_bounds = array<i64: 12, 128>}, {pipeline_mode = #tpu.pipeline_mode<synchronous>, transform_indices = @transform_2, window_bounds = array<i64: 1, 128>}, {pipeline_mode = #tpu.pipeline_mode<synchronous>, transform_indices = @transform_3, window_bounds = array<i64: 128, 128>}, {pipeline_mode = #tpu.pipeline_mode<synchronous>, transform_indices = @transform_4, window_bounds = array<i64: 1, 128>}, {pipeline_mode = #tpu.pipeline_mode<synchronous>, transform_indices = @transform_5, window_bounds = array<i64: 128, 4>}, {pipeline_mode = #tpu.pipeline_mode<synchronous>, transform_indices = @transform_6, window_bounds = array<i64: 1, 4>}, {transform_indices = @transform_7, window_bounds = array<i64: 32, 4>}]} {
    %c0 = arith.constant 0 : index
    %c0_0 = arith.constant 0 : index
    %0 = vector.load %arg1[%c0, %c0_0] : memref<32x12xf32, #tpu.memory_space<vmem>>, vector<32x12xf32>
    %c0_1 = arith.constant 0 : index
    %c0_2 = arith.constant 0 : index
    %1 = vector.load %arg2[%c0_1, %c0_2] : memref<12x128xf32, #tpu.memory_space<vmem>>, vector<12x128xf32>
    %cst = arith.constant dense<0.000000e+00> : vector<32x128xf32>
    %2 = tpu.matmul %0, %1, %cst {dimension_numbers = #tpu.dot_dimension_numbers<[1], [0], [0], [1], [0, 0, 1, 1], [], []>} : vector<32x12xf32>, vector<12x128xf32>, vector<32x128xf32> -> vector<32x128xf32>
    %c0_3 = arith.constant 0 : index
    %c0_4 = arith.constant 0 : index
    %3 = vector.load %arg3[%c0_3, %c0_4] : memref<1x128xf32, #tpu.memory_space<vmem>>, vector<1x128xf32>
    %4 = vector.broadcast %3 : vector<1x128xf32> to vector<32x128xf32>
    %5 = arith.addf %2, %4 : vector<32x128xf32>
    %cst_5 = arith.constant 0.000000e+00 : f32
    %6 = vector.broadcast %cst_5 : f32 to vector<32x128xf32>
    %7 = arith.maximumf %5, %6 : vector<32x128xf32>
    %c0_6 = arith.constant 0 : index
    %c0_7 = arith.constant 0 : index
    %8 = vector.load %arg4[%c0_6, %c0_7] : memref<128x128xf32, #tpu.memory_space<vmem>>, vector<128x128xf32>
    %cst_8 = arith.constant dense<0.000000e+00> : vector<32x128xf32>
    %9 = tpu.matmul %7, %8, %cst_8 {dimension_numbers = #tpu.dot_dimension_numbers<[1], [0], [0], [1], [0, 0, 1, 1], [], []>} : vector<32x128xf32>, vector<128x128xf32>, vector<32x128xf32> -> vector<32x128xf32>
    %c0_9 = arith.constant 0 : index
    %c0_10 = arith.constant 0 : index
    %10 = vector.load %arg5[%c0_9, %c0_10] : memref<1x128xf32, #tpu.memory_space<vmem>>, vector<1x128xf32>
    %11 = vector.broadcast %10 : vector<1x128xf32> to vector<32x128xf32>
    %12 = arith.addf %9, %11 : vector<32x128xf32>
    %cst_11 = arith.constant 0.000000e+00 : f32
    %13 = vector.broadcast %cst_11 : f32 to vector<32x128xf32>
    %14 = arith.maximumf %12, %13 : vector<32x128xf32>
    %c0_12 = arith.constant 0 : index
    %c0_13 = arith.constant 0 : index
    %15 = vector.load %arg6[%c0_12, %c0_13] : memref<128x4xf32, #tpu.memory_space<vmem>>, vector<128x4xf32>
    %cst_14 = arith.constant dense<0.000000e+00> : vector<32x4xf32>
    %16 = tpu.matmul %14, %15, %cst_14 {dimension_numbers = #tpu.dot_dimension_numbers<[1], [0], [0], [1], [0, 0, 1, 1], [], []>} : vector<32x128xf32>, vector<128x4xf32>, vector<32x4xf32> -> vector<32x4xf32>
    %c0_15 = arith.constant 0 : index
    %c0_16 = arith.constant 0 : index
    %17 = vector.load %arg7[%c0_15, %c0_16] : memref<1x4xf32, #tpu.memory_space<vmem>>, vector<1x4xf32>
    %18 = vector.broadcast %17 : vector<1x4xf32> to vector<32x4xf32>
    %19 = arith.addf %16, %18 : vector<32x4xf32>
    %c0_17 = arith.constant 0 : index
    %c0_18 = arith.constant 0 : index
    %20 = vector.load %arg8[%c0_17, %c0_18] : memref<32x4xf32, #tpu.memory_space<vmem>>, vector<32x4xf32>
    tpu.vector_store %arg8[%c0_17, %c0_18], %19 {strides = array<i32>} : memref<32x4xf32, #tpu.memory_space<vmem>>, vector<32x4xf32>,
    return
  }
  func.func @transform_0(%arg0: i32) -> (i32, i32) {
    %c0_i32 = arith.constant 0 : i32
    %c0_i32_0 = arith.constant 0 : i32
    return %arg0, %c0_i32 : i32, i32
  }
  func.func @transform_1(%arg0: i32) -> (i32, i32) {
    %c0_i32 = arith.constant 0 : i32
    %c0_i32_0 = arith.constant 0 : i32
    %c0_i32_1 = arith.constant 0 : i32
    return %c0_i32, %c0_i32_0 : i32, i32
  }
  func.func @transform_2(%arg0: i32) -> (i32, i32) {
    %c0_i32 = arith.constant 0 : i32
    %c0_i32_0 = arith.constant 0 : i32
    %c0_i32_1 = arith.constant 0 : i32
    return %c0_i32, %c0_i32_0 : i32, i32
  }
  func.func @transform_3(%arg0: i32) -> (i32, i32) {
    %c0_i32 = arith.constant 0 : i32
    %c0_i32_0 = arith.constant 0 : i32
    %c0_i32_1 = arith.constant 0 : i32
    return %c0_i32, %c0_i32_0 : i32, i32
  }
  func.func @transform_4(%arg0: i32) -> (i32, i32) {
    %c0_i32 = arith.constant 0 : i32
    %c0_i32_0 = arith.constant 0 : i32
    %c0_i32_1 = arith.constant 0 : i32
    return %c0_i32, %c0_i32_0 : i32, i32
  }
  func.func @transform_5(%arg0: i32) -> (i32, i32) {
    %c0_i32 = arith.constant 0 : i32
    %c0_i32_0 = arith.constant 0 : i32
    %c0_i32_1 = arith.constant 0 : i32
    return %c0_i32, %c0_i32_0 : i32, i32
  }
  func.func @transform_6(%arg0: i32) -> (i32, i32) {
    %c0_i32 = arith.constant 0 : i32
    %c0_i32_0 = arith.constant 0 : i32
    %c0_i32_1 = arith.constant 0 : i32
    return %c0_i32, %c0_i32_0 : i32, i32
  }
  func.func @transform_7(%arg0: i32) -> (i32, i32) {
    %c0_i32 = arith.constant 0 : i32
    %c0_i32_0 = arith.constant 0 : i32
    return %arg0, %c0_i32 : i32, i32
  }
}

</mosaic_0001>

<llo_original>
// kernel: cmlp_forward.1
$region0: #{cmlp_forward.1}
  #allocation0 [shape = 'u32[]', space=smem, size = 0x4, offset = 0x4, fixed_abs, tag = 'smem constant byte address 0x4 - core index']
  #allocation1 [shape = 'u32[144,128]{1,0:T(1,128)}', space=vmem, size = 0x12000, scoped, tag = 'internal scratch']
  %s0 = inlined_call_operand.vmem [shape: f32[64,12], index: 0, kind: input, shape index: {}]
  %s1 = inlined_call_operand.vmem [shape: f32[12,128], index: 1, kind: input, shape index: {}]
  %s2 = inlined_call_operand.vmem [shape: f32[1,128], index: 2, kind: input, shape index: {}]
  %s3 = inlined_call_operand.vmem [shape: f32[128,128], index: 3, kind: input, shape index: {}]
  %s4 = inlined_call_operand.vmem [shape: f32[1,128], index: 4, kind: input, shape index: {}]
  %s5 = inlined_call_operand.vmem [shape: f32[128,4], index: 5, kind: input, shape index: {}]
  %s6 = inlined_call_operand.vmem [shape: f32[1,4], index: 6, kind: input, shape index: {}]
  %s7 = inlined_call_operand.vmem [shape: f32[64,4], index: 7, kind: output, shape index: {}]
  %s8 = sld [smem:[#allocation0]]
  $region61: #{cmlp_forward.1} parent=0
    _
  %s10 = ssub.s32 1, %s8
  %s11 = scalar_select 0, %s10, %s8
  loop: start=0, step=1, limit=4
  $region2: #{cmlp_forward.1} parent=0 // loop_pre_header
    _
  $region3: #{cmlp_forward.1} parent=0 // loop_header
    %s13 = sphi 0, %s17
    %p14 = scmp.ge.s32.totalorder %s13, 4
    %s23 = sphi 0, %s25
    %s26 = sphi 0, %s23
    %s27 = sphi 0, %s26
    %s43 = sphi 0, %s27
    %s47 = sphi 0, %s47
    %s49 = sphi 0, %s47
    %s50 = sphi 0, %s49
    %s64 = sphi 0, %s50
    %s68 = sphi 0, %s68
    %s70 = sphi 0, %s68
    %s71 = sphi 0, %s70
    %s85 = sphi 0, %s71
    %s89 = sphi 0, %s89
    %s91 = sphi 0, %s89
    %s92 = sphi 0, %s91
    %s106 = sphi 0, %s92
    %s110 = sphi 0, %s110
    %s112 = sphi 0, %s110
    %s113 = sphi 0, %s112
    %s127 = sphi 0, %s113
    %s131 = sphi 0, %s131
    %s133 = sphi 0, %s131
    %s134 = sphi 0, %s133
    %s148 = sphi 0, %s134
    %s152 = sphi 0, %s152
    %s154 = sphi 0, %s152
    %s155 = sphi 0, %s154
    %s169 = sphi 0, %s155
    %s175 = sphi 0, %s177
    %s178 = sphi 0, %s175
    %s179 = sphi 0, %s178
    %s195 = sphi 0, %s179
  $region4: #{cmlp_forward.1} parent=0 // loop_header_branch
    %16 = sbr.rel (%p14) target = $region8
  $region5: #{cmlp_forward.1} parent=0 // loop_body
    %s18 = ssub.s32 %s13, 1
    %s19 = ssub.s32 %s13, 2
    %s20 = sadd.s32 %s13, 1
    %s21 = ssub.s32 %s13, %s20
    %p22 = scmp.eq.s32.totalorder %s21, 0
    %s24 = sadd.s32 %s23, 1
    %s25 = scalar_select %p22, %s23, %s24
    %p28 = pneg %p22
    %p29 = scmp.eq.s32.totalorder %s13, 1
    %p30 = por %p28, %p29
    %p31 = scmp.ne.s32.totalorder %s23, %s26
    %p32 = scmp.eq.s32.totalorder %s13, 0
    %p33 = por %p31, %p32
    %p34 = scmp.ne.s32.totalorder %s23, %s26
    %p35 = scmp.eq.s32.totalorder %s18, 1
    %p36 = por %p34, %p35
    %p37 = scmp.ne.s32.totalorder %s26, %s27
    %p38 = scmp.eq.s32.totalorder %s18, 0
    %p39 = por %p37, %p38
    %p40 = scmp.ne.s32.totalorder %s26, %s27
    %p41 = scmp.eq.s32.totalorder %s19, 1
    %p42 = por %p40, %p41
    %p44 = scmp.ne.s32.totalorder %s27, %s43
    %p45 = scmp.eq.s32.totalorder %s19, 0
    %p46 = por %p44, %p45
    %s48 = sadd.s32 %s47, 1
    %p51 = scmp.eq.s32.totalorder %s13, 1
    %p52 = scmp.ne.s32.totalorder %s47, %s49
    %p53 = scmp.eq.s32.totalorder %s13, 0
    %p54 = por %p52, %p53
    %p55 = scmp.ne.s32.totalorder %s47, %s49
    %p56 = scmp.eq.s32.totalorder %s18, 1
    %p57 = por %p55, %p56
    %p58 = scmp.ne.s32.totalorder %s49, %s50
    %p59 = scmp.eq.s32.totalorder %s18, 0
    %p60 = por %p58, %p59
    %p61 = scmp.ne.s32.totalorder %s49, %s50
    %p62 = scmp.eq.s32.totalorder %s19, 1
    %p63 = por %p61, %p62
    %p65 = scmp.ne.s32.totalorder %s50, %s64
    %p66 = scmp.eq.s32.totalorder %s19, 0
    %p67 = por %p65, %p66
    %s69 = sadd.s32 %s68, 1
    %p72 = scmp.eq.s32.totalorder %s13, 1
    %p73 = scmp.ne.s32.totalorder %s68, %s70
    %p74 = scmp.eq.s32.totalorder %s13, 0
    %p75 = por %p73, %p74
    %p76 = scmp.ne.s32.totalorder %s68, %s70
    %p77 = scmp.eq.s32.totalorder %s18, 1
    %p78 = por %p76, %p77
    %p79 = scmp.ne.s32.totalorder %s70, %s71
    %p80 = scmp.eq.s32.totalorder %s18, 0
    %p81 = por %p79, %p80
    %p82 = scmp.ne.s32.totalorder %s70, %s71
    %p83 = scmp.eq.s32.totalorder %s19, 1
    %p84 = por %p82, %p83
    %p86 = scmp.ne.s32.totalorder %s71, %s85
    %p87 = scmp.eq.s32.totalorder %s19, 0
    %p88 = por %p86, %p87
    %s90 = sadd.s32 %s89, 1
    %p93 = scmp.eq.s32.totalorder %s13, 1
    %p94 = scmp.ne.s32.totalorder %s89, %s91
    %p95 = scmp.eq.s32.totalorder %s13, 0
    %p96 = por %p94, %p95
    %p97 = scmp.ne.s32.totalorder %s89, %s91
    %p98 = scmp.eq.s32.totalorder %s18, 1
    %p99 = por %p97, %p98
    %p100 = scmp.ne.s32.totalorder %s91, %s92
    %p101 = scmp.eq.s32.totalorder %s18, 0
    %p102 = por %p100, %p101
    %p103 = scmp.ne.s32.totalorder %s91, %s92
    %p104 = scmp.eq.s32.totalorder %s19, 1
    %p105 = por %p103, %p104
    %p107 = scmp.ne.s32.totalorder %s92, %s106
    %p108 = scmp.eq.s32.totalorder %s19, 0
    %p109 = por %p107, %p108
    %s111 = sadd.s32 %s110, 1
    %p114 = scmp.eq.s32.totalorder %s13, 1
    %p115 = scmp.ne.s32.totalorder %s110, %s112
    %p116 = scmp.eq.s32.totalorder %s13, 0
    %p117 = por %p115, %p116
    %p118 = scmp.ne.s32.totalorder %s110, %s112
    %p119 = scmp.eq.s32.totalorder %s18, 1
    %p120 = por %p118, %p119
    %p121 = scmp.ne.s32.totalorder %s112, %s113
    %p122 = scmp.eq.s32.totalorder %s18, 0
    %p123 = por %p121, %p122
    %p124 = scmp.ne.s32.totalorder %s112, %s113
    %p125 = scmp.eq.s32.totalorder %s19, 1
    %p126 = por %p124, %p125
    %p128 = scmp.ne.s32.totalorder %s113, %s127
    %p129 = scmp.eq.s32.totalorder %s19, 0
    %p130 = por %p128, %p129
    %s132 = sadd.s32 %s131, 1
    %p135 = scmp.eq.s32.totalorder %s13, 1
    %p136 = scmp.ne.s32.totalorder %s131, %s133
    %p137 = scmp.eq.s32.totalorder %s13, 0
    %p138 = por %p136, %p137
    %p139 = scmp.ne.s32.totalorder %s131, %s133
    %p140 = scmp.eq.s32.totalorder %s18, 1
    %p141 = por %p139, %p140
    %p142 = scmp.ne.s32.totalorder %s133, %s134
    %p143 = scmp.eq.s32.totalorder %s18, 0
    %p144 = por %p142, %p143
    %p145 = scmp.ne.s32.totalorder %s133, %s134
    %p146 = scmp.eq.s32.totalorder %s19, 1
    %p147 = por %p145, %p146
    %p149 = scmp.ne.s32.totalorder %s134, %s148
    %p150 = scmp.eq.s32.totalorder %s19, 0
    %p151 = por %p149, %p150
    %s153 = sadd.s32 %s152, 1
    %p156 = scmp.eq.s32.totalorder %s13, 1
    %p157 = scmp.ne.s32.totalorder %s152, %s154
    %p158 = scmp.eq.s32.totalorder %s13, 0
    %p159 = por %p157, %p158
    %p160 = scmp.ne.s32.totalorder %s152, %s154
    %p161 = scmp.eq.s32.totalorder %s18, 1
    %p162 = por %p160, %p161
    %p163 = scmp.ne.s32.totalorder %s154, %s155
    %p164 = scmp.eq.s32.totalorder %s18, 0
    %p165 = por %p163, %p164
    %p166 = scmp.ne.s32.totalorder %s154, %s155
    %p167 = scmp.eq.s32.totalorder %s19, 1
    %p168 = por %p166, %p167
    %p170 = scmp.ne.s32.totalorder %s155, %s169
    %p171 = scmp.eq.s32.totalorder %s19, 0
    %p172 = por %p170, %p171
    %s173 = ssub.s32 %s13, %s20
    %p174 = scmp.eq.s32.totalorder %s173, 0
    %s176 = sadd.s32 %s175, 1
    %s177 = scalar_select %p174, %s175, %s176
    %p180 = pneg %p174
    %p181 = scmp.eq.s32.totalorder %s13, 1
    %p182 = por %p180, %p181
    %p183 = scmp.ne.s32.totalorder %s175, %s178
    %p184 = scmp.eq.s32.totalorder %s13, 0
    %p185 = por %p183, %p184
    %p186 = scmp.ne.s32.totalorder %s175, %s178
    %p187 = scmp.eq.s32.totalorder %s18, 1
    %p188 = por %p186, %p187
    %p189 = scmp.ne.s32.totalorder %s178, %s179
    %p190 = scmp.eq.s32.totalorder %s18, 0
    %p191 = por %p189, %p190
    %p192 = scmp.ne.s32.totalorder %s178, %s179
    %p193 = scmp.eq.s32.totalorder %s19, 1
    %p194 = por %p192, %p193
    %p196 = scmp.ne.s32.totalorder %s179, %s195
    %p197 = scmp.eq.s32.totalorder %s19, 0
    %p198 = por %p196, %p197
    %p199 = scmp.le.s32.totalorder 1, %s13
    %p200 = scmp.lt.s32.totalorder %s13, 3
    %p201 = pnand %p199, %p200
    %p202 = pneg %p201
    // Predicated region
    $region9: #{cmlp_forward.1} parent=5 // pred_check
      _
    $region10: #{cmlp_forward.1} parent=5 // pred_check_branch
      %204 = sbr.rel (%p201) target = $region12
    $region11: #{cmlp_forward.1} parent=5 // pred_region
      %s205 = ssub.s32 %s13, 1
      // Predicated region
      $region13: #{cmlp_forward.1} parent=11 // pred_check
        %p206 = pneg %p60
      $region14: #{cmlp_forward.1} parent=11 // pred_check_branch
        %208 = sbr.rel (%p206) target = $region16
      $region15: #{cmlp_forward.1} parent=11 // pred_region
        _
      $region16: #{cmlp_forward.1} parent=11 // pred_fallthru
        _
      // Predicated region
      $region17: #{cmlp_forward.1} parent=11 // pred_check
        %p209 = pneg %p81
      $region18: #{cmlp_forward.1} parent=11 // pred_check_branch
        %211 = sbr.rel (%p209) target = $region20
      $region19: #{cmlp_forward.1} parent=11 // pred_region
        _
      $region20: #{cmlp_forward.1} parent=11 // pred_fallthru
        _
      // Predicated region
      $region21: #{cmlp_forward.1} parent=11 // pred_check
        %p212 = pneg %p102
      $region22: #{cmlp_forward.1} parent=11 // pred_check_branch
        %214 = sbr.rel (%p212) target = $region24
      $region23: #{cmlp_forward.1} parent=11 // pred_region
        _
      $region24: #{cmlp_forward.1} parent=11 // pred_fallthru
        _
      // Predicated region
      $region25: #{cmlp_forward.1} parent=11 // pred_check
        %p215 = pneg %p123
      $region26: #{cmlp_forward.1} parent=11 // pred_check_branch
        %217 = sbr.rel (%p215) target = $region28
      $region27: #{cmlp_forward.1} parent=11 // pred_region
        _
      $region28: #{cmlp_forward.1} parent=11 // pred_fallthru
        _
      // Predicated region
      $region29: #{cmlp_forward.1} parent=11 // pred_check
        %p218 = pneg %p144
      $region30: #{cmlp_forward.1} parent=11 // pred_check_branch
        %220 = sbr.rel (%p218) target = $region32
      $region31: #{cmlp_forward.1} parent=11 // pred_region
        _
      $region32: #{cmlp_forward.1} parent=11 // pred_fallthru
        _
      // Predicated region
      $region33: #{cmlp_forward.1} parent=11 // pred_check
        %p221 = pneg %p165
      $region34: #{cmlp_forward.1} parent=11 // pred_check_branch
        %223 = sbr.rel (%p221) target = $region36
      $region35: #{cmlp_forward.1} parent=11 // pred_region
        _
      $region36: #{cmlp_forward.1} parent=11 // pred_fallthru
        _
    $region12: #{cmlp_forward.1} parent=5 // pred_fallthru
      _
    %p224 = scmp.lt.s32.totalorder %s13, 2
    // Predicated region
    $region37: #{cmlp_forward.1} parent=5 // pred_check
      %p225 = pneg %p224
    $region38: #{cmlp_forward.1} parent=5 // pred_check_branch
      %227 = sbr.rel (%p225) target = $region40
    $region39: #{cmlp_forward.1} parent=5 // pred_region
      // Predicated region
      $region41: #{cmlp_forward.1} parent=39 // pred_check
        %p228 = pneg %p33
      $region42: #{cmlp_forward.1} parent=39 // pred_check_branch
        %230 = sbr.rel (%p228) target = $region44
      $region43: #{cmlp_forward.1} parent=39 // pred_region
        %s231 = smul.u32 4, %s13
        %p232 = scmp.lt.s32.totalorder %s231, 7
        %s233 = scalar_select %p232, %s231, 7
        %s234 = smul.addr %s233, 8
        %s235 = scalar_lea.vmem %s0, %s234
        %s236 = smul.u32 4, %s13
      $region44: #{cmlp_forward.1} parent=39 // pred_fallthru
        _
    $region40: #{cmlp_forward.1} parent=5 // pred_fallthru
      _
    %p237 = scmp.le.s32.totalorder 1, %s13
    %p238 = scmp.lt.s32.totalorder %s13, 3
    %p239 = pnand %p237, %p238
    %p240 = pneg %p239
    // Predicated region
    $region45: #{cmlp_forward.1} parent=5 // pred_check
      _
    $region46: #{cmlp_forward.1} parent=5 // pred_check_branch
      %242 = sbr.rel (%p239) target = $region48
    $region47: #{cmlp_forward.1} parent=5 // pred_region
      %s243 = ssub.s32 %s13, 1
      %s244 = smul.u32 4, %s18
      %p245 = scmp.lt.s32.totalorder %s244, 7
      %s246 = scalar_select %p245, %s244, 7
      %s247 = smul.addr %s246, 8
      %s248 = scalar_lea.vmem %s0, %s247
      %p249 = pneg %p39
      %p250 = pneg %p36
      %p251 = pneg %p60
      %p252 = pneg %p57
      %p253 = pneg %p81
      %p254 = pneg %p78
      %p255 = pneg %p102
      %p256 = pneg %p99
      %p257 = pneg %p123
      %p258 = pneg %p120
      %p259 = pneg %p144
      %p260 = pneg %p141
      %p261 = pneg %p165
      %p262 = pneg %p162
      %p263 = pneg %p191
      %p264 = pneg %p188
      %s265 = smul.u32 4, %s18
      %p266 = scmp.lt.s32.totalorder %s265, 7
      %s267 = scalar_select %p266, %s265, 7
      %s268 = smul.addr %s267, 8
      %s269 = scalar_lea.vmem %s7, %s268
      %s270 = smul.u32 4, %s18
      %p271 = scmp.lt.s32.totalorder %s270, 7
      %s272 = scalar_select %p271, %s270, 7
      %s273 = smul.addr %s272, 8
      %s274 = scalar_lea.vmem %s0, %s273
      %s275 = smul.u32 4, %s18
      %s276 = smul.u32 4, %s18
      %p277 = scmp.lt.s32.totalorder %s276, 7
      %s278 = scalar_select %p277, %s276, 7
      %s279 = smul.addr %s278, 8
      %s280 = scalar_lea.vmem %s7, %s279
      %s281 = smul.u32 4, %s18
      %v282 = vld [vmem:[%s274] sm:$0xff]
      %v283 = vld [vmem:[%s274 + $0x8] sm:$0xff]
      %v284 = vld [vmem:[%s274 + $0x10] sm:$0xff]
      %v285 = vld [vmem:[%s274 + $0x18] sm:$0xff]
      %v286 = vld [vmem:[%s1] sm:$0xff]
      %v287 = vld [vmem:[%s1 + $0x8] sm:$0xf]
      %v288 = vld [vmem:[%s2] sm:$0x1]
      %v290 = vlaneseq
      %v291 = vshrl.u32 %v290, 7
      %v292 = vsub.s32 0, %v291
      %v293 = vrot.slane %v288, %v292
      %vm295 = vcmask 97280
      %v297 = vsel %vm295, %v282, 0
      %v300 = vsel %vm295, %v283, 0
      %v303 = vsel %vm295, %v284, 0
      %v306 = vsel %vm295, %v285, 0
      %vm308 = vcmask 1043456
      %v310 = vsel %vm308, %v287, 0
      %312 = vmatprep.subr.mxu0 0.0
      %313 = vmatpush1.msra.mxu0 %v286
      %314 = vmatprep.subr.mxu0 0.0
      %315 = vmatpush1.msra.mxu0 %v310
      %316 = vmatprep.subr.mxu0 0.0
      %317 = vmatpush1.msra.mxu0 0.0
      %318 = vmatprep.subr.mxu0 0.0
      %319 = vmatpush1.msra.mxu0 0.0
      %320 = vmatprep.subr.mxu0 0.0
      %321 = vmatpush1.msra.mxu0 0.0
      %322 = vmatprep.subr.mxu0 0.0
      %323 = vmatpush1.msra.mxu0 0.0
      %324 = vmatprep.subr.mxu0 0.0
      %325 = vmatpush1.msra.mxu0 0.0
      %326 = vmatprep.subr.mxu0 0.0
      %327 = vmatpush1.msra.mxu0 0.0
      %328 = vmatprep.subr.mxu0 0.0
      %329 = vmatpush1.msra.mxu0 0.0
      %330 = vmatprep.subr.mxu0 0.0
      %331 = vmatpush1.msra.mxu0 0.0
      %332 = vmatprep.subr.mxu0 0.0
      %333 = vmatpush1.msra.mxu0 0.0
      %334 = vmatprep.subr.mxu0 0.0
      %335 = vmatpush1.msra.mxu0 0.0
      %336 = vmatprep.subr.mxu0 0.0
      %337 = vmatpush1.msra.mxu0 0.0
      %338 = vmatprep.subr.mxu0 0.0
      %339 = vmatpush1.msra.mxu0 0.0
      %340 = vmatprep.subr.mxu0 0.0
      %341 = vmatpush1.msra.mxu0 0.0
      %342 = vmatprep.subr.mxu0 0.0
      %343 = vmatpush1.msra.mxu0 0.0
      %344 = vmatprep.subr.mxu0 0.0
      %345 = vmatpush1.msra.mxu0 0.0
      %346 = vmatprep.subr.mxu0 0.0
      %347 = vmatpush1.msra.mxu0 0.0
      %348 = vmatprep.subr.mxu0 0.0
      %349 = vmatpush1.msra.mxu0 0.0
      %350 = vmatprep.subr.mxu0 0.0
      %351 = vmatpush1.msra.mxu0 0.0
      %352 = vmatprep.subr.mxu0 0.0
      %353 = vmatpush1.msra.mxu0 0.0
      %354 = vmatprep.subr.mxu0 0.0
      %355 = vmatpush1.msra.mxu0 0.0
      %356 = vmatprep.subr.mxu0 0.0
      %357 = vmatpush1.msra.mxu0 0.0
      %358 = vmatprep.subr.mxu0 0.0
      %359 = vmatpush1.msra.mxu0 0.0
      %360 = vmatprep.subr.mxu0 0.0
      %361 = vmatpush1.msra.mxu0 0.0
      %362 = vmatprep.subr.mxu0 0.0
      %363 = vmatpush1.msra.mxu0 0.0
      %364 = vmatprep.subr.mxu0 0.0
      %365 = vmatpush1.msra.mxu0 0.0
      %366 = vmatprep.subr.mxu0 0.0
      %367 = vmatpush1.msra.mxu0 0.0
      %368 = vmatprep.subr.mxu0 0.0
      %369 = vmatpush1.msra.mxu0 0.0
      %370 = vmatprep.subr.mxu0 0.0
      %371 = vmatpush1.msra.mxu0 0.0
      %372 = vmatprep.subr.mxu0 0.0
      %373 = vmatpush1.msra.mxu0 0.0
      %374 = vmatprep.subr.mxu0 0.0
      %375 = vmatpush1.msra.mxu0 0.0
      %376 = vmatprep.mubr.f32.mxu0 0.0
      %377 = vmatmul.mubr.f32.gmra.mrb[0].mxu0 %v297
      %v378 = vpop.f32.mrb[0].mxu0
      %v379 = vadd.f32 %v293, %v378
      %v380 = vpop.f32.mrb[0].mxu0
      %381 = vmatprep.mubr.f32.mxu0 0.0
      %382 = vmatmul.mubr.f32.gmra.mrb[0].mxu0 %v300
      %v383 = vpop.f32.mrb[0].mxu0
      %v384 = vadd.f32 %v293, %v383
      %v385 = vpop.f32.mrb[0].mxu0
      %386 = vmatprep.mubr.f32.mxu0 0.0
      %387 = vmatmul.mubr.f32.gmra.mrb[0].mxu0 %v303
      %v388 = vpop.f32.mrb[0].mxu0
      %v389 = vadd.f32 %v293, %v388
      %v390 = vpop.f32.mrb[0].mxu0
      %391 = vmatprep.mubr.f32.mxu0 0.0
      %392 = vmatmul.mubr.f32.gmra.mrb[0].mxu0 %v306
      %v393 = vpop.f32.mrb[0].mxu0
      %v394 = vadd.f32 %v293, %v393
      %v395 = vpop.f32.mrb[0].mxu0
      %396 = vdwg.mxu0
      %v397 = vmax.f32 %v379, 0.0
      %v398 = vmax.f32 %v384, 0.0
      %v399 = vmax.f32 %v389, 0.0
      %v400 = vmax.f32 %v394, 0.0
      %v401 = vld [vmem:[%s3] sm:$0xff]
      %v402 = vld [vmem:[%s3 + $0x8] sm:$0xff]
      %v403 = vld [vmem:[%s3 + $0x10] sm:$0xff]
      %v404 = vld [vmem:[%s3 + $0x18] sm:$0xff]
      %v405 = vld [vmem:[%s3 + $0x20] sm:$0xff]
      %v406 = vld [vmem:[%s3 + $0x28] sm:$0xff]
      %v407 = vld [vmem:[%s3 + $0x30] sm:$0xff]
      %v408 = vld [vmem:[%s3 + $0x38] sm:$0xff]
      %v409 = vld [vmem:[%s3 + $0x40] sm:$0xff]
      %v410 = vld [vmem:[%s3 + $0x48] sm:$0xff]
      %v411 = vld [vmem:[%s3 + $0x50] sm:$0xff]
      %v412 = vld [vmem:[%s3 + $0x58] sm:$0xff]
      %v413 = vld [vmem:[%s3 + $0x60] sm:$0xff]
      %v414 = vld [vmem:[%s3 + $0x68] sm:$0xff]
      %v415 = vld [vmem:[%s3 + $0x70] sm:$0xff]
      %v416 = vld [vmem:[%s3 + $0x78] sm:$0xff]
      %v417 = vld [vmem:[%s4] sm:$0x1]
      %v419 = vlaneseq
      %v420 = vshrl.u32 %v419, 7
      %v421 = vsub.s32 0, %v420
      %v422 = vrot.slane %v417, %v421
      %424 = vmatprep.subr.mxu0 0.0
      %425 = vmatpush1.msra.mxu0 %v401
      %426 = vmatprep.subr.mxu0 0.0
      %427 = vmatpush1.msra.mxu0 %v402
      %428 = vmatprep.subr.mxu0 0.0
      %429 = vmatpush1.msra.mxu0 %v403
      %430 = vmatprep.subr.mxu0 0.0
      %431 = vmatpush1.msra.mxu0 %v404
      %432 = vmatprep.subr.mxu0 0.0
      %433 = vmatpush1.msra.mxu0 %v405
      %434 = vmatprep.subr.mxu0 0.0
      %435 = vmatpush1.msra.mxu0 %v406
      %436 = vmatprep.subr.mxu0 0.0
      %437 = vmatpush1.msra.mxu0 %v407
      %438 = vmatprep.subr.mxu0 0.0
      %439 = vmatpush1.msra.mxu0 %v408
      %440 = vmatprep.subr.mxu0 0.0
      %441 = vmatpush1.msra.mxu0 %v409
      %442 = vmatprep.subr.mxu0 0.0
      %443 = vmatpush1.msra.mxu0 %v410
      %444 = vmatprep.subr.mxu0 0.0
      %445 = vmatpush1.msra.mxu0 %v411
      %446 = vmatprep.subr.mxu0 0.0
      %447 = vmatpush1.msra.mxu0 %v412
      %448 = vmatprep.subr.mxu0 0.0
      %449 = vmatpush1.msra.mxu0 %v413
      %450 = vmatprep.subr.mxu0 0.0
      %451 = vmatpush1.msra.mxu0 %v414
      %452 = vmatprep.subr.mxu0 0.0
      %453 = vmatpush1.msra.mxu0 %v415
      %454 = vmatprep.subr.mxu0 0.0
      %455 = vmatpush1.msra.mxu0 %v416
      %456 = vmatprep.subr.mxu0 0.0
      %457 = vmatpush1.msra.mxu0 0.0
      %458 = vmatprep.subr.mxu0 0.0
      %459 = vmatpush1.msra.mxu0 0.0
      %460 = vmatprep.subr.mxu0 0.0
      %461 = vmatpush1.msra.mxu0 0.0
      %462 = vmatprep.subr.mxu0 0.0
      %463 = vmatpush1.msra.mxu0 0.0
      %464 = vmatprep.subr.mxu0 0.0
      %465 = vmatpush1.msra.mxu0 0.0
      %466 = vmatprep.subr.mxu0 0.0
      %467 = vmatpush1.msra.mxu0 0.0
      %468 = vmatprep.subr.mxu0 0.0
      %469 = vmatpush1.msra.mxu0 0.0
      %470 = vmatprep.subr.mxu0 0.0
      %471 = vmatpush1.msra.mxu0 0.0
      %472 = vmatprep.subr.mxu0 0.0
      %473 = vmatpush1.msra.mxu0 0.0
      %474 = vmatprep.subr.mxu0 0.0
      %475 = vmatpush1.msra.mxu0 0.0
      %476 = vmatprep.subr.mxu0 0.0
      %477 = vmatpush1.msra.mxu0 0.0
      %478 = vmatprep.subr.mxu0 0.0
      %479 = vmatpush1.msra.mxu0 0.0
      %480 = vmatprep.subr.mxu0 0.0
      %481 = vmatpush1.msra.mxu0 0.0
      %482 = vmatprep.subr.mxu0 0.0
      %483 = vmatpush1.msra.mxu0 0.0
      %484 = vmatprep.subr.mxu0 0.0
      %485 = vmatpush1.msra.mxu0 0.0
      %486 = vmatprep.subr.mxu0 0.0
      %487 = vmatpush1.msra.mxu0 0.0
      %488 = vmatprep.mubr.f32.mxu0 0.0
      %489 = vmatmul.mubr.f32.gmra.mrb[0].mxu0 %v397
      %v490 = vpop.f32.mrb[0].mxu0
      %v491 = vadd.f32 %v422, %v490
      %v492 = vpop.f32.mrb[0].mxu0
      %493 = vmatprep.mubr.f32.mxu0 0.0
      %494 = vmatmul.mubr.f32.gmra.mrb[0].mxu0 %v398
      %v495 = vpop.f32.mrb[0].mxu0
      %v496 = vadd.f32 %v422, %v495
      %v497 = vpop.f32.mrb[0].mxu0
      %498 = vmatprep.mubr.f32.mxu0 0.0
      %499 = vmatmul.mubr.f32.gmra.mrb[0].mxu0 %v399
      %v500 = vpop.f32.mrb[0].mxu0
      %v501 = vadd.f32 %v422, %v500
      %v502 = vpop.f32.mrb[0].mxu0
      %503 = vmatprep.mubr.f32.mxu0 0.0
      %504 = vmatmul.mubr.f32.gmra.mrb[0].mxu0 %v400
      %v505 = vpop.f32.mrb[0].mxu0
      %v506 = vadd.f32 %v422, %v505
      %v507 = vpop.f32.mrb[0].mxu0
      %508 = vdwg.mxu0
      %v509 = vmax.f32 %v491, 0.0
      %v510 = vmax.f32 %v496, 0.0
      %v511 = vmax.f32 %v501, 0.0
      %v512 = vmax.f32 %v506, 0.0
      %v513 = vld [vmem:[%s5] sm:$0xff]
      %v514 = vld [vmem:[%s5 + $0x8] sm:$0xff]
      %v515 = vld [vmem:[%s5 + $0x10] sm:$0xff]
      %v516 = vld [vmem:[%s5 + $0x18] sm:$0xff]
      %v517 = vld [vmem:[%s5 + $0x20] sm:$0xff]
      %v518 = vld [vmem:[%s5 + $0x28] sm:$0xff]
      %v519 = vld [vmem:[%s5 + $0x30] sm:$0xff]
      %v520 = vld [vmem:[%s5 + $0x38] sm:$0xff]
      %v521 = vld [vmem:[%s5 + $0x40] sm:$0xff]
      %v522 = vld [vmem:[%s5 + $0x48] sm:$0xff]
      %v523 = vld [vmem:[%s5 + $0x50] sm:$0xff]
      %v524 = vld [vmem:[%s5 + $0x58] sm:$0xff]
      %v525 = vld [vmem:[%s5 + $0x60] sm:$0xff]
      %v526 = vld [vmem:[%s5 + $0x68] sm:$0xff]
      %v527 = vld [vmem:[%s5 + $0x70] sm:$0xff]
      %v528 = vld [vmem:[%s5 + $0x78] sm:$0xff]
      %v529 = vld [vmem:[%s6] sm:$0x1]
      %v531 = vlaneseq
      %v532 = vshrl.u32 %v531, 7
      %v533 = vsub.s32 0, %v532
      %v534 = vrot.slane %v529, %v533
      %536 = vmatprep.subr.mxu0 0.0
      %537 = vmatpush1.msra.mxu0 %v513
      %538 = vmatprep.subr.mxu0 0.0
      %539 = vmatpush1.msra.mxu0 %v514
      %540 = vmatprep.subr.mxu0 0.0
      %541 = vmatpush1.msra.mxu0 %v515
      %542 = vmatprep.subr.mxu0 0.0
      %543 = vmatpush1.msra.mxu0 %v516
      %544 = vmatprep.subr.mxu0 0.0
      %545 = vmatpush1.msra.mxu0 %v517
      %546 = vmatprep.subr.mxu0 0.0
      %547 = vmatpush1.msra.mxu0 %v518
      %548 = vmatprep.subr.mxu0 0.0
      %549 = vmatpush1.msra.mxu0 %v519
      %550 = vmatprep.subr.mxu0 0.0
      %551 = vmatpush1.msra.mxu0 %v520
      %552 = vmatprep.subr.mxu0 0.0
      %553 = vmatpush1.msra.mxu0 %v521
      %554 = vmatprep.subr.mxu0 0.0
      %555 = vmatpush1.msra.mxu0 %v522
      %556 = vmatprep.subr.mxu0 0.0
      %557 = vmatpush1.msra.mxu0 %v523
      %558 = vmatprep.subr.mxu0 0.0
      %559 = vmatpush1.msra.mxu0 %v524
      %560 = vmatprep.subr.mxu0 0.0
      %561 = vmatpush1.msra.mxu0 %v525
      %562 = vmatprep.subr.mxu0 0.0
      %563 = vmatpush1.msra.mxu0 %v526
      %564 = vmatprep.subr.mxu0 0.0
      %565 = vmatpush1.msra.mxu0 %v527
      %566 = vmatprep.subr.mxu0 0.0
      %567 = vmatpush1.msra.mxu0 %v528
      %568 = vmatprep.subr.mxu0 0.0
      %569 = vmatpush1.msra.mxu0 0.0
      %570 = vmatprep.subr.mxu0 0.0
      %571 = vmatpush1.msra.mxu0 0.0
      %572 = vmatprep.subr.mxu0 0.0
      %573 = vmatpush1.msra.mxu0 0.0
      %574 = vmatprep.subr.mxu0 0.0
      %575 = vmatpush1.msra.mxu0 0.0
      %576 = vmatprep.subr.mxu0 0.0
      %577 = vmatpush1.msra.mxu0 0.0
      %578 = vmatprep.subr.mxu0 0.0
      %579 = vmatpush1.msra.mxu0 0.0
      %580 = vmatprep.subr.mxu0 0.0
      %581 = vmatpush1.msra.mxu0 0.0
      %582 = vmatprep.subr.mxu0 0.0
      %583 = vmatpush1.msra.mxu0 0.0
      %584 = vmatprep.subr.mxu0 0.0
      %585 = vmatpush1.msra.mxu0 0.0
      %586 = vmatprep.subr.mxu0 0.0
      %587 = vmatpush1.msra.mxu0 0.0
      %588 = vmatprep.subr.mxu0 0.0
      %589 = vmatpush1.msra.mxu0 0.0
      %590 = vmatprep.subr.mxu0 0.0
      %591 = vmatpush1.msra.mxu0 0.0
      %592 = vmatprep.subr.mxu0 0.0
      %593 = vmatpush1.msra.mxu0 0.0
      %594 = vmatprep.subr.mxu0 0.0
      %595 = vmatpush1.msra.mxu0 0.0
      %596 = vmatprep.subr.mxu0 0.0
      %597 = vmatpush1.msra.mxu0 0.0
      %598 = vmatprep.subr.mxu0 0.0
      %599 = vmatpush1.msra.mxu0 0.0
      %600 = vmatprep.mubr.f32.mxu0 0.0
      %601 = vmatmul.mubr.f32.gmra.mrb[0].mxu0 %v509
      %v602 = vpop.f32.mrb[0].mxu0
      %v603 = vadd.f32 %v534, %v602
      %v604 = vpop.f32.mrb[0].mxu0
      %605 = vmatprep.mubr.f32.mxu0 0.0
      %606 = vmatmul.mubr.f32.gmra.mrb[0].mxu0 %v510
      %v607 = vpop.f32.mrb[0].mxu0
      %v608 = vadd.f32 %v534, %v607
      %v609 = vpop.f32.mrb[0].mxu0
      %610 = vmatprep.mubr.f32.mxu0 0.0
      %611 = vmatmul.mubr.f32.gmra.mrb[0].mxu0 %v511
      %v612 = vpop.f32.mrb[0].mxu0
      %v613 = vadd.f32 %v534, %v612
      %v614 = vpop.f32.mrb[0].mxu0
      %615 = vmatprep.mubr.f32.mxu0 0.0
      %616 = vmatmul.mubr.f32.gmra.mrb[0].mxu0 %v512
      %v617 = vpop.f32.mrb[0].mxu0
      %v618 = vadd.f32 %v534, %v617
      %v619 = vpop.f32.mrb[0].mxu0
      %620 = vdwg.mxu0
      %vm621 = vcmask 31744
      %622 = vst.msk [vmem:[%s280] sm:$0xff] %vm621, %v603
      %623 = vst.msk [vmem:[%s280 + $0x8] sm:$0xff] %vm621, %v608
      %624 = vst.msk [vmem:[%s280 + $0x10] sm:$0xff] %vm621, %v613
      %625 = vst.msk [vmem:[%s280 + $0x18] sm:$0xff] %vm621, %v618
      %s626 = smul.u32 4, %s18
      %p627 = scmp.lt.s32.totalorder %s626, 7
      %s628 = scalar_select %p627, %s626, 7
      %s629 = smul.addr %s628, 8
      %s630 = scalar_lea.vmem %s7, %s629
      // Predicated region
      $region49: #{cmlp_forward.1} parent=47 // pred_check
        %p631 = pneg %p188
      $region50: #{cmlp_forward.1} parent=47 // pred_check_branch
        %633 = sbr.rel (%p631) target = $region52
      $region51: #{cmlp_forward.1} parent=47 // pred_region
        %s634 = smul.u32 4, %s18
      $region52: #{cmlp_forward.1} parent=47 // pred_fallthru
        _
    $region48: #{cmlp_forward.1} parent=5 // pred_fallthru
      _
    %p635 = scmp.le.s32.totalorder 2, %s13
    // Predicated region
    $region53: #{cmlp_forward.1} parent=5 // pred_check
      %p636 = pneg %p635
    $region54: #{cmlp_forward.1} parent=5 // pred_check_branch
      %638 = sbr.rel (%p636) target = $region56
    $region55: #{cmlp_forward.1} parent=5 // pred_region
      %s639 = ssub.s32 %s13, 2
      // Predicated region
      $region57: #{cmlp_forward.1} parent=55 // pred_check
        %p640 = pneg %p194
      $region58: #{cmlp_forward.1} parent=55 // pred_check_branch
        %642 = sbr.rel (%p640) target = $region60
      $region59: #{cmlp_forward.1} parent=55 // pred_region
        %s643 = smul.u32 4, %s19
        %p644 = scmp.lt.s32.totalorder %s643, 7
        %s645 = scalar_select %p644, %s643, 7
        %s646 = smul.addr %s645, 8
        %s647 = scalar_lea.vmem %s7, %s646
      $region60: #{cmlp_forward.1} parent=55 // pred_fallthru
        _
    $region56: #{cmlp_forward.1} parent=5 // pred_fallthru
      _
  $region6: #{cmlp_forward.1} parent=0 // loop_footer
    %s17 = sadd.s32 1, %s13
  $region7: #{cmlp_forward.1} parent=0 // loop_footer_branch
    %12 = sbr.rel target = $region3
  $region8: #{cmlp_forward.1} parent=0 // loop_exit
    _

</llo_original>
